<compile_context>
chip_gen: v7x
topology: tpu7x:2x2x1
jax: 0.10.0
libtpu: 0.0.40
codegen_flags: <defaults>
</compile_context>

<pallas_src>
import functools

import jax
import jax.numpy as jnp
from jax.experimental import pallas as pl
from jax.experimental.pallas import tpu as pltpu


# Cap any single (input) block at this many bytes so DMAs are large but the
# tile never balloons for tiny hidden sizes.
_PER_BUFFER_CAP_BYTES = 8 * 1024 * 1024


def _round_up(x, m):
    return (x + m - 1) // m * m


def _round_down_to_multiple(x, m):
    return max(m, (x // m) * m)


@functools.lru_cache(maxsize=1)
def _tpu_profile():
    """Generation-aware VMEM budgets and minimum grid-step target."""
    vmem = 128 * 1024 * 1024
    try:
        info = pltpu.get_tpu_info()
        vmem = int(getattr(info, "vmem_capacity_bytes", vmem))
    except Exception:
        pass
    if vmem <= 64 * 1024 * 1024:
        # v7x-class: 64 MiB physical VMEM per TC, 2 TCs/chip.  Keep buffers +
        # f32 temporaries + compiler scratch comfortably under the scoped limit.
        buffer_budget = 22 * 1024 * 1024
        vmem_limit = 48 * 1024 * 1024
        # >=2 steps per TensorCore: megacore row split + pipeline overlap.
        min_grid_steps = 4
    else:
        # v5e/v6e-class: 128 MiB physical VMEM, single TC.  Bigger blocks
        # amortize per-step overhead; only a few steps needed for overlap.
        buffer_budget = 56 * 1024 * 1024
        vmem_limit = 96 * 1024 * 1024
        min_grid_steps = 3
    return buffer_budget, vmem_limit, min_grid_steps


def _pick_row_tile(rows, hidden, in_itemsize, out_itemsize, buffer_budget,
                   min_grid_steps):
    """Largest row tile whose VMEM footprint fits the budget."""
    # Sublane packing: 8 rows for 32-bit dtypes, 16 for 16-bit, 32 for 8-bit.
    sub = max(8, 32 // max(1, min(in_itemsize, out_itemsize)))
    # Per-row footprint: double-buffered input + output tiles, plus the two
    # row_tile x hidden f32 temporaries the body materializes (x_f32 / h).
    per_row_bytes = hidden * (in_itemsize + out_itemsize) * 2 + 2 * hidden * 4
    tile = max(sub, buffer_budget // max(per_row_bytes, 1))
    # Byte-based cap on a single input block (replaces the old 1024-row cap)
    # so small-hidden models still get large DMAs without unbounded tiles.
    tile = min(tile, max(sub, _PER_BUFFER_CAP_BYTES // max(hidden * in_itemsize, 1)))
    # Leave enough grid steps for pipelining / megacore sharding when rows
    # permit (generation-specific target).
    tile = min(tile, _round_up(pl.cdiv(rows, min_grid_steps), sub))
    # Never larger than the (sublane-padded) row count.
    tile = min(tile, _round_up(rows, sub))
    return _round_down_to_multiple(tile, sub)


def _t5_layernorm_kernel(x_ref, w_ref, o_ref, *, eps, cast_to_weight_dtype,
                         weight_dtype):
    # x_ref: (row_tile, hidden), w_ref: (1, hidden), o_ref: (row_tile, hidden)
    x_f32 = x_ref[...].astype(jnp.float32)
    # variance = mean(x^2) over the last dim, in float32 (matches .to(float32)).
    variance = jnp.mean(x_f32 * x_f32, axis=-1, keepdims=True)
    inv = jax.lax.rsqrt(variance + eps)  # EUP; effectively free slot-wise.
    # Second pass re-reads the input in its storage dtype and redoes the cheap
    # VPU upconvert instead of keeping a full f32 temp live across the
    # reduction — keeps VMEM pressure / vld-vst traffic low (matters on v7x).
    h = x_ref[...].astype(jnp.float32) * inv
    # PyTorch: cast back to weight dtype only if weight is fp16/bf16.
    if cast_to_weight_dtype:
        h = h.astype(weight_dtype)
    # (1, hidden) weight broadcasts implicitly along sublanes.
    o_ref[...] = (w_ref[...] * h).astype(o_ref.dtype)


def t5_layernorm(x, weight, eps=1e-6, row_tile=None):
    """x: (..., hidden), weight: (hidden,). Returns weight * RMS-normalized x."""
    orig_shape = x.shape
    hidden = orig_shape[-1]
    rows = 1
    for d in orig_shape[:-1]:
        rows *= d
    x2d = x.reshape(rows, hidden)
    w2d = weight.reshape(1, hidden)

    weight_dtype = jnp.dtype(weight.dtype)
    cast_to_weight_dtype = weight_dtype in (jnp.dtype(jnp.float16),
                                            jnp.dtype(jnp.bfloat16))
    # Output dtype matches PyTorch promotion of `weight * hidden_states`.
    if cast_to_weight_dtype:
        out_dtype = weight_dtype
    else:
        out_dtype = jnp.promote_types(weight_dtype, jnp.float32)

    in_itemsize = jnp.dtype(x.dtype).itemsize
    out_itemsize = jnp.dtype(out_dtype).itemsize
    buffer_budget, vmem_limit, min_grid_steps = _tpu_profile()
    if row_tile is None:
        row_tile = _pick_row_tile(rows, hidden, in_itemsize, out_itemsize,
                                  buffer_budget, min_grid_steps)

    # Ragged final block instead of host-side pad + slice: Pallas masks
    # out-of-bounds writes in the last block, and the garbage rows it reads
    # only affect their own (discarded) per-row reductions — no extra HBM
    # passes over the activation.
    grid_steps = pl.cdiv(rows, row_tile)

    # TODO(synk): for hidden not a multiple of 128 (rare for real T5 sizes),
    # stores are masked partial vst; a one-time host-side lane-dense repack of
    # the hidden dim would help there.

    kernel = functools.partial(
        _t5_layernorm_kernel,
        eps=float(eps),
        cast_to_weight_dtype=cast_to_weight_dtype,
        weight_dtype=weight_dtype,
    )

    cost = pl.CostEstimate(
        flops=4 * rows * hidden,
        transcendentals=rows,
        bytes_accessed=(rows * hidden * (in_itemsize + out_itemsize)
                        + hidden * weight_dtype.itemsize),
    )

    out = pl.pallas_call(
        kernel,
        out_shape=jax.ShapeDtypeStruct((rows, hidden), out_dtype),
        grid_spec=pltpu.PrefetchScalarGridSpec(
            num_scalar_prefetch=0,
            grid=(grid_steps,),
            in_specs=[
                pl.BlockSpec((row_tile, hidden), lambda i: (i, 0)),
                pl.BlockSpec((1, hidden), lambda i: (0, 0)),
            ],
            out_specs=pl.BlockSpec((row_tile, hidden), lambda i: (i, 0)),
        ),
        compiler_params=pltpu.CompilerParams(
            dimension_semantics=("parallel",),
            vmem_limit_bytes=vmem_limit,
        ),
        cost_estimate=cost,
    )(x2d, w2d)

    return out.reshape(orig_shape[:-1] + (hidden,))


def t5_layernorm_ref(x, weight, eps=1e-6):
    x_f32 = x.astype(jnp.float32)
    variance = jnp.mean(x_f32 * x_f32, axis=-1, keepdims=True)
    h = x_f32 * jax.lax.rsqrt(variance + eps)
    if weight.dtype in (jnp.dtype(jnp.float16), jnp.dtype(jnp.bfloat16)):
        h = h.astype(weight.dtype)
    return weight * h


if __name__ == "__main__":
    key = jax.random.PRNGKey(0)

    # Case 1: f32 weight (default nn.Parameter(torch.ones(hidden)) path).
    batch, seq, hidden = 2, 8, 32
    x = jax.random.normal(key, (batch, seq, hidden), dtype=jnp.float32)
    weight = jnp.ones((hidden,), dtype=jnp.float32)
    out = jax.block_until_ready(t5_layernorm(x, weight, eps=1e-6))
    ref = t5_layernorm_ref(x, weight, eps=1e-6)
    assert out.shape == ref.shape and out.dtype == ref.dtype
    assert jnp.allclose(out, ref, atol=1e-5, rtol=1e-5)

    # Case 2: bf16 weight + row count not divisible by the tile (ragged block).
    k1, k2 = jax.random.split(key)
    batch2, seq2, hidden2 = 3, 7, 256
    x2 = jax.random.normal(k1, (batch2, seq2, hidden2), dtype=jnp.bfloat16)
    weight2 = (1.0 + 0.01 * jax.random.normal(k2, (hidden2,))).astype(jnp.bfloat16)
    out2 = jax.block_until_ready(t5_layernorm(x2, weight2, eps=1e-6))
    ref2 = t5_layernorm_ref(x2, weight2, eps=1e-6)
    assert out2.shape == ref2.shape and out2.dtype == ref2.dtype
    assert jnp.allclose(out2.astype(jnp.float32), ref2.astype(jnp.float32),
                        atol=1e-2, rtol=1e-2)

    print("KERNEL_OK")
</pallas_src>

<mosaic_0001>
module attributes {stable_mosaic.version = 11 : i64} {
  func.func @_t5_layernorm_kernel(%arg0: i32, %arg1: memref<8x32xf32, #tpu.memory_space<vmem>>, %arg2: memref<1x32xf32, #tpu.memory_space<vmem>>, %arg3: memref<8x32xf32, #tpu.memory_space<vmem>>) attributes {dimension_semantics = [#tpu.dimension_semantics<parallel>], iteration_bounds = array<i64: 2>, scalar_prefetch = 0 : i64, scratch_operands = 0 : i64, tpu.core_type = #tpu.core_type<tc>, window_params = [{transform_indices = @transform_0, window_bounds = array<i64: 8, 32>}, {pipeline_mode = #tpu.pipeline_mode<synchronous>, transform_indices = @transform_1, window_bounds = array<i64: 1, 32>}, {transform_indices = @transform_2, window_bounds = array<i64: 8, 32>}]} {
    %c0 = arith.constant 0 : index
    %c0_0 = arith.constant 0 : index
    %0 = vector.load %arg1[%c0, %c0_0] : memref<8x32xf32, #tpu.memory_space<vmem>>, vector<8x32xf32>
    %1 = arith.mulf %0, %0 : vector<8x32xf32>
    %cst = arith.constant dense<0.000000e+00> : vector<8xf32>
    %2 = vector.multi_reduction <add>, %1, %cst [1] : vector<8x32xf32> to vector<8xf32>
    %3 = vector.shape_cast %2 : vector<8xf32> to vector<8x1xf32>
    %cst_1 = arith.constant 3.200000e+01 : f32
    %4 = vector.broadcast %cst_1 : f32 to vector<8x1xf32>
    %5 = arith.divf %3, %4 : vector<8x1xf32>
    %cst_2 = arith.constant 9.99999997E-7 : f32
    %6 = vector.broadcast %cst_2 : f32 to vector<8x1xf32>
    %7 = arith.addf %5, %6 : vector<8x1xf32>
    %8 = math.rsqrt %7 : vector<8x1xf32>
    %c0_3 = arith.constant 0 : index
    %c0_4 = arith.constant 0 : index
    %9 = vector.load %arg1[%c0_3, %c0_4] : memref<8x32xf32, #tpu.memory_space<vmem>>, vector<8x32xf32>
    %10 = vector.broadcast %8 : vector<8x1xf32> to vector<8x32xf32>
    %11 = arith.mulf %9, %10 : vector<8x32xf32>
    %c0_5 = arith.constant 0 : index
    %c0_6 = arith.constant 0 : index
    %12 = vector.load %arg2[%c0_5, %c0_6] : memref<1x32xf32, #tpu.memory_space<vmem>>, vector<1x32xf32>
    %13 = vector.broadcast %12 : vector<1x32xf32> to vector<8x32xf32>
    %14 = arith.mulf %13, %11 : vector<8x32xf32>
    %c0_7 = arith.constant 0 : index
    %c0_8 = arith.constant 0 : index
    %15 = vector.load %arg3[%c0_7, %c0_8] : memref<8x32xf32, #tpu.memory_space<vmem>>, vector<8x32xf32>
    tpu.vector_store %arg3[%c0_7, %c0_8], %14 {strides = array<i32>} : memref<8x32xf32, #tpu.memory_space<vmem>>, vector<8x32xf32>,
    return
  }
  func.func @transform_0(%arg0: i32) -> (i32, i32) {
    %c0_i32 = arith.constant 0 : i32
    %c0_i32_0 = arith.constant 0 : i32
    return %arg0, %c0_i32 : i32, i32
  }
  func.func @transform_1(%arg0: i32) -> (i32, i32) {
    %c0_i32 = arith.constant 0 : i32
    %c0_i32_0 = arith.constant 0 : i32
    %c0_i32_1 = arith.constant 0 : i32
    return %c0_i32, %c0_i32_0 : i32, i32
  }
  func.func @transform_2(%arg0: i32) -> (i32, i32) {
    %c0_i32 = arith.constant 0 : i32
    %c0_i32_0 = arith.constant 0 : i32
    return %arg0, %c0_i32 : i32, i32
  }
}

</mosaic_0001>

<llo_original>
// kernel: tpu_custom_call.1
$region0: #{tpu_custom_call.1}
  #allocation0 [shape = 'u32[]', space=smem, size = 0x4, offset = 0x4, fixed_abs, tag = 'smem constant byte address 0x4 - core index']
  #allocation1 [shape = 'u32[144,128]{1,0:T(1,128)}', space=vmem, size = 0x12000, scoped, tag = 'internal scratch']
  %s0 = inlined_call_operand.hbm [shape: f32[16,32], index: 0, kind: input, shape index: {}]
  %s1 = inlined_call_operand.hbm [shape: f32[1,32], index: 1, kind: input, shape index: {}]
  %s2 = inlined_call_operand.hbm [shape: f32[16,32], index: 2, kind: output, shape index: {}]
  %s3 = sld [smem:[#allocation0]]
  $region49: #{tpu_custom_call.1} parent=0
    _
  %s5 = ssub.s32 1, %s3
  %s6 = scalar_select 0, %s5, %s3
  $region1: #{tpu_custom_call.1} parent=0
    #allocation2 [shape = 'u8[8192]{0}', space=vmem, size = 0x2000, scoped, tag = 'input window, operand 0']
    #allocation3 [shape = 's32[2]{0}', space=sflag, size = 0x8, scoped, tag = 'scoped memory for tpu_custom_call.1']
    #allocation4 [shape = 's32[2]{0}', space=sflag, size = 0x8, scoped, tag = 'scoped memory for tpu_custom_call.1']
    #allocation5 [shape = 'u8[512]{0}', space=vmem, size = 0x400, scoped, tag = 'input window, operand 1, single buffered']
    #allocation6 [shape = 's32[1]{0}', space=sflag, size = 0x4, scoped, tag = 'scoped memory for tpu_custom_call.1']
    #allocation7 [shape = 'u8[8192]{0}', space=vmem, size = 0x2000, scoped, tag = 'output window, operand 0']
    %7 = vsyncpa [#allocation3], 0
    %s8 = scalar_lea.sflag [#allocation3], 1
    %9 = vsyncpa %s8, 0
    %10 = vsyncpa [#allocation6], 0
    %11 = vsyncpa [#allocation4], 0
    %s12 = scalar_lea.sflag [#allocation4], 1
    %13 = vsyncpa %s12, 0
    loop: start=0, step=1, limit=4
    $region2: #{tpu_custom_call.1} parent=1 // loop_pre_header
      _
    $region3: #{tpu_custom_call.1} parent=1 // loop_header
      %s15 = sphi 0, %s19
      %p16 = scmp.ge.s32.totalorder %s15, 4
      %s25 = sphi 0, %s27
      %s28 = sphi 0, %s25
      %s29 = sphi 0, %s28
      %s45 = sphi 0, %s29
      %s49 = sphi 0, %s49
      %s51 = sphi 0, %s49
      %s52 = sphi 0, %s51
      %s66 = sphi 0, %s52
      %s72 = sphi 0, %s74
      %s75 = sphi 0, %s72
      %s76 = sphi 0, %s75
      %s92 = sphi 0, %s76
    $region4: #{tpu_custom_call.1} parent=1 // loop_header_branch
      %18 = sbr.rel (%p16) target = $region8
    $region5: #{tpu_custom_call.1} parent=1 // loop_body
      %s20 = ssub.s32 %s15, 1
      %s21 = ssub.s32 %s15, 2
      %s22 = sadd.s32 %s15, 1
      %s23 = ssub.s32 %s15, %s22
      %p24 = scmp.eq.s32.totalorder %s23, 0
      %s26 = sadd.s32 %s25, 1
      %s27 = scalar_select %p24, %s25, %s26
      %p30 = pneg %p24
      %p31 = scmp.eq.s32.totalorder %s15, 1
      %p32 = por %p30, %p31
      %p33 = scmp.ne.s32.totalorder %s25, %s28
      %p34 = scmp.eq.s32.totalorder %s15, 0
      %p35 = por %p33, %p34
      %p36 = scmp.ne.s32.totalorder %s25, %s28
      %p37 = scmp.eq.s32.totalorder %s20, 1
      %p38 = por %p36, %p37
      %p39 = scmp.ne.s32.totalorder %s28, %s29
      %p40 = scmp.eq.s32.totalorder %s20, 0
      %p41 = por %p39, %p40
      %p42 = scmp.ne.s32.totalorder %s28, %s29
      %p43 = scmp.eq.s32.totalorder %s21, 1
      %p44 = por %p42, %p43
      %p46 = scmp.ne.s32.totalorder %s29, %s45
      %p47 = scmp.eq.s32.totalorder %s21, 0
      %p48 = por %p46, %p47
      %s50 = sadd.s32 %s49, 1
      %p53 = scmp.eq.s32.totalorder %s15, 1
      %p54 = scmp.ne.s32.totalorder %s49, %s51
      %p55 = scmp.eq.s32.totalorder %s15, 0
      %p56 = por %p54, %p55
      %p57 = scmp.ne.s32.totalorder %s49, %s51
      %p58 = scmp.eq.s32.totalorder %s20, 1
      %p59 = por %p57, %p58
      %p60 = scmp.ne.s32.totalorder %s51, %s52
      %p61 = scmp.eq.s32.totalorder %s20, 0
      %p62 = por %p60, %p61
      %p63 = scmp.ne.s32.totalorder %s51, %s52
      %p64 = scmp.eq.s32.totalorder %s21, 1
      %p65 = por %p63, %p64
      %p67 = scmp.ne.s32.totalorder %s52, %s66
      %p68 = scmp.eq.s32.totalorder %s21, 0
      %p69 = por %p67, %p68
      %s70 = ssub.s32 %s15, %s22
      %p71 = scmp.eq.s32.totalorder %s70, 0
      %s73 = sadd.s32 %s72, 1
      %s74 = scalar_select %p71, %s72, %s73
      %p77 = pneg %p71
      %p78 = scmp.eq.s32.totalorder %s15, 1
      %p79 = por %p77, %p78
      %p80 = scmp.ne.s32.totalorder %s72, %s75
      %p81 = scmp.eq.s32.totalorder %s15, 0
      %p82 = por %p80, %p81
      %p83 = scmp.ne.s32.totalorder %s72, %s75
      %p84 = scmp.eq.s32.totalorder %s20, 1
      %p85 = por %p83, %p84
      %p86 = scmp.ne.s32.totalorder %s75, %s76
      %p87 = scmp.eq.s32.totalorder %s20, 0
      %p88 = por %p86, %p87
      %p89 = scmp.ne.s32.totalorder %s75, %s76
      %p90 = scmp.eq.s32.totalorder %s21, 1
      %p91 = por %p89, %p90
      %p93 = scmp.ne.s32.totalorder %s76, %s92
      %p94 = scmp.eq.s32.totalorder %s21, 0
      %p95 = por %p93, %p94
      %p96 = scmp.le.s32.totalorder 1, %s15
      %p97 = scmp.lt.s32.totalorder %s15, 3
      %p98 = pnand %p96, %p97
      %p99 = pneg %p98
      // Predicated region
      $region9: #{tpu_custom_call.1} parent=5 // pred_check
        _
      $region10: #{tpu_custom_call.1} parent=5 // pred_check_branch
        %101 = sbr.rel (%p98) target = $region12
      $region11: #{tpu_custom_call.1} parent=5 // pred_region
        %s102 = ssub.s32 %s15, 1
        // Predicated region
        $region13: #{tpu_custom_call.1} parent=11 // pred_check
          %p103 = pneg %p62
        $region14: #{tpu_custom_call.1} parent=11 // pred_check_branch
          %105 = sbr.rel (%p103) target = $region16
        $region15: #{tpu_custom_call.1} parent=11 // pred_region
          %s107 = ssub.s32 16, 16
          %108 = vsyncadd [#allocation6], %s107
          %s110 = sshll.u32 [#allocation5], 4
          %s111 = int_to_ptr.vmem [resolvable:$true] %s110
          %113 = dma.hbm_to_vmem [thread:$0]  %s1, 16, %s111, [#allocation6]
        $region16: #{tpu_custom_call.1} parent=11 // pred_fallthru
          _
      $region12: #{tpu_custom_call.1} parent=5 // pred_fallthru
        _
      %p114 = scmp.lt.s32.totalorder %s15, 2
      // Predicated region
      $region17: #{tpu_custom_call.1} parent=5 // pred_check
        %p115 = pneg %p114
      $region18: #{tpu_custom_call.1} parent=5 // pred_check_branch
        %117 = sbr.rel (%p115) target = $region20
      $region19: #{tpu_custom_call.1} parent=5 // pred_region
        // Predicated region
        $region21: #{tpu_custom_call.1} parent=19 // pred_check
          %p118 = pneg %p35
        $region22: #{tpu_custom_call.1} parent=19 // pred_check_branch
          %120 = sbr.rel (%p118) target = $region24
        $region23: #{tpu_custom_call.1} parent=19 // pred_region
          %s121 = sand.u32 %s25, 1
          %s122 = scalar_lea.sflag [#allocation3], %s121
          %s123 = sand.u32 %s25, 1
          %s124 = smul.addr %s123, 8
          %s125 = scalar_lea.vmem [#allocation2], %s124
          %s127 = ssub.s32 128, 128
          %128 = vsyncadd %s122, %s127
          %s129 = smul.addr %s15, 128
          %s130 = scalar_lea.hbm %s0, %s129
          %s132 = sshll.u32 %s125, 4
          %s133 = int_to_ptr.vmem [resolvable:$true] %s132
          %135 = dma.hbm_to_vmem [thread:$0]  %s130, 128, %s133, %s122
        $region24: #{tpu_custom_call.1} parent=19 // pred_fallthru
          _
      $region20: #{tpu_custom_call.1} parent=5 // pred_fallthru
        _
      %p136 = scmp.le.s32.totalorder 1, %s15
      %p137 = scmp.lt.s32.totalorder %s15, 3
      %p138 = pnand %p136, %p137
      %p139 = pneg %p138
      // Predicated region
      $region25: #{tpu_custom_call.1} parent=5 // pred_check
        _
      $region26: #{tpu_custom_call.1} parent=5 // pred_check_branch
        %141 = sbr.rel (%p138) target = $region28
      $region27: #{tpu_custom_call.1} parent=5 // pred_region
        %s142 = ssub.s32 %s15, 1
        %s143 = sand.u32 %s28, 1
        %s144 = scalar_lea.sflag [#allocation3], %s143
        %s145 = sand.u32 %s28, 1
        %s146 = smul.addr %s145, 8
        %s147 = scalar_lea.vmem [#allocation2], %s146
        // Predicated region
        $region29: #{tpu_custom_call.1} parent=27 // pred_check
          %p148 = pneg %p41
        $region30: #{tpu_custom_call.1} parent=27 // pred_check_branch
          %150 = sbr.rel (%p148) target = $region32
        $region31: #{tpu_custom_call.1} parent=27 // pred_region
          %151 = dma.done %s144, 128
        $region32: #{tpu_custom_call.1} parent=27 // pred_fallthru
          _
        // Predicated region
        $region33: #{tpu_custom_call.1} parent=27 // pred_check
          %p152 = pneg %p62
        $region34: #{tpu_custom_call.1} parent=27 // pred_check_branch
          %154 = sbr.rel (%p152) target = $region36
        $region35: #{tpu_custom_call.1} parent=27 // pred_region
          %155 = dma.done [#allocation6], 16
        $region36: #{tpu_custom_call.1} parent=27 // pred_fallthru
          _
        %s156 = sand.u32 %s28, 1
        %s157 = scalar_lea.sflag [#allocation3], %s156
        %s158 = sand.u32 %s28, 1
        %s159 = smul.addr %s158, 8
        %s160 = scalar_lea.vmem [#allocation2], %s159
        %p161 = pneg %p41
        %p162 = pneg %p38
        %p163 = pneg %p62
        %p164 = pneg %p59
        %p165 = pneg %p88
        %p166 = pneg %p85
        %s167 = sand.u32 %s75, 1
        %s168 = scalar_lea.sflag [#allocation4], %s167
        %s169 = sand.u32 %s75, 1
        %s170 = smul.addr %s169, 8
        %s171 = scalar_lea.vmem [#allocation7], %s170
        %v172 = vld [vmem:[%s147] sm:$0xff]
        %v173 = vmul.f32 %v172, %v172
        %vm174 = vcmask 261120
        %v175 = vsel %vm174, %v173, 0.0
        %176 = vadd.xlane.f32.xlu0 %v175
        %v177 = vpop.xlane.xlu0 %176
        %v178 = vrcp.pop 32.0
        %v179 = vmul.f32 %v177, %v178
        %v180 = vadd.f32 %v179, 1e-06
        %v181 = vrsqrt.pop %v180
        %v182 = vmul.f32 %v172, %v181
        %v183 = vld [vmem:[#allocation5] sm:$0x1]
        %v185 = vlaneseq
        %v186 = vshrl.u32 %v185, 7
        %v187 = vsub.s32 0, %v186
        %v188 = vrot.slane %v183, %v187
        %v190 = vmul.f32 %v188, %v182
        %191 = vst.msk [vmem:[%s171] sm:$0xff] %vm174, %v190
        %s192 = sand.u32 %s75, 1
        %s193 = scalar_lea.sflag [#allocation4], %s192
        %s194 = sand.u32 %s75, 1
        %s195 = smul.addr %s194, 8
        %s196 = scalar_lea.vmem [#allocation7], %s195
        // Predicated region
        $region37: #{tpu_custom_call.1} parent=27 // pred_check
          %p197 = pneg %p85
        $region38: #{tpu_custom_call.1} parent=27 // pred_check_branch
          %199 = sbr.rel (%p197) target = $region40
        $region39: #{tpu_custom_call.1} parent=27 // pred_region
          %s201 = ssub.s32 128, 128
          %202 = vsyncadd %s193, %s201
          %s203 = smul.addr %s20, 128
          %s204 = scalar_lea.hbm %s2, %s203
          %s206 = sshll.u32 %s196, 4
          %s207 = int_to_ptr.vmem [resolvable:$true] %s206
          %209 = dma.vmem_to_hbm [thread:$0]  %s207, 128, %s204, %s193
        $region40: #{tpu_custom_call.1} parent=27 // pred_fallthru
          _
      $region28: #{tpu_custom_call.1} parent=5 // pred_fallthru
        _
      %p210 = scmp.le.s32.totalorder 2, %s15
      // Predicated region
      $region41: #{tpu_custom_call.1} parent=5 // pred_check
        %p211 = pneg %p210
      $region42: #{tpu_custom_call.1} parent=5 // pred_check_branch
        %213 = sbr.rel (%p211) target = $region44
      $region43: #{tpu_custom_call.1} parent=5 // pred_region
        %s214 = ssub.s32 %s15, 2
        // Predicated region
        $region45: #{tpu_custom_call.1} parent=43 // pred_check
          %p215 = pneg %p91
        $region46: #{tpu_custom_call.1} parent=43 // pred_check_branch
          %217 = sbr.rel (%p215) target = $region48
        $region47: #{tpu_custom_call.1} parent=43 // pred_region
          %s218 = sand.u32 %s76, 1
          %s219 = scalar_lea.sflag [#allocation4], %s218
          %s220 = sand.u32 %s76, 1
          %s221 = smul.addr %s220, 8
          %s222 = scalar_lea.vmem [#allocation7], %s221
          %223 = dma.done %s219, 128
        $region48: #{tpu_custom_call.1} parent=43 // pred_fallthru
          _
      $region44: #{tpu_custom_call.1} parent=5 // pred_fallthru
        _
    $region6: #{tpu_custom_call.1} parent=1 // loop_footer
      %s19 = sadd.s32 1, %s15
    $region7: #{tpu_custom_call.1} parent=1 // loop_footer_branch
      %14 = sbr.rel target = $region3
    $region8: #{tpu_custom_call.1} parent=1 // loop_exit
      _
    %224 = vsyncpa [#allocation3], 1
    %s225 = scalar_lea.sflag [#allocation3], 1
    %226 = vsyncpa %s225, 1
    %227 = vsyncpa [#allocation6], 1
    %228 = vsyncpa [#allocation4], 1
    %s229 = scalar_lea.sflag [#allocation4], 1
    %230 = vsyncpa %s229, 1

</llo_original>
